<compile_context>
chip_gen: v5e
topology: v5e:2x2
jax: 0.10.0
libtpu: 0.0.40
codegen_flags: <defaults>
</compile_context>

<pallas_src>
import functools
import math

import jax
import jax.numpy as jnp
from jax import lax
from jax.experimental import pallas as pl
from jax.experimental.pallas import tpu as pltpu


# Abramowitz & Stegun 4.4.47:  acos(t) ~= sqrt(1-t) * poly(t)  for 0 <= t <= 1,
# |error| <= 2e-8.  For t < 0:  acos(t) = pi - acos(-t).
_ACOS_POLY = (-0.0012624911, 0.0066700901, -0.0170881256, 0.0308918810,
              -0.0501743046, 0.0889789874, -0.2145988016, 1.5707963050)


def _acos(c):
    """Elementwise arccos for c in [-1, 1] (polynomial, TPU-lowerable)."""
    ax = jnp.abs(c)
    p = jnp.float32(_ACOS_POLY[0])
    for coef in _ACOS_POLY[1:]:
        p = p * ax + jnp.float32(coef)
    r = jnp.sqrt(jnp.maximum(1.0 - ax, 0.0)) * p          # acos(|c|) in [0, pi/2]
    return jnp.where(c >= 0.0, r, jnp.float32(math.pi) - r)


def _l2_normalize_rows(v):
    """v / max(||v||_2, 1e-12) as rsqrt(max(sum(v^2), 1e-24)) -- matches F.normalize."""
    sum_sq = jnp.sum(v * v, axis=-1, keepdims=True)
    return v * lax.rsqrt(jnp.maximum(sum_sq, jnp.float32(1e-24)))


# ----------------------------- kernel ----------------------------------------

def _airface_kernel(label_ref, x_ref, w_ref, out_ref, *, s, m, block_c):
    """Fused: normalize -> cosine (MXU) -> clamp -> acos -> angular margin -> scale."""
    xn = _l2_normalize_rows(x_ref[...].astype(jnp.float32))   # (tm, D)
    wn = _l2_normalize_rows(w_ref[...].astype(jnp.float32))   # (tn, D)

    # (tm, D) . (tn, D)^T -> (tm, tn), contraction over the feature axis.
    cos = lax.dot_general(
        xn, wn,
        dimension_numbers=(((1,), (1,)), ((), ())),
        preferred_element_type=jnp.float32)
    cos = jnp.clip(cos, -1.0, 1.0)

    theta = _acos(cos)

    # one-hot for this (tm, tn) tile: global column index == label row.
    col = lax.broadcasted_iota(jnp.int32, cos.shape, 1) + pl.program_id(1) * block_c
    is_target = col == label_ref[...]                      # (tm,1) int32 broadcast

    # s*(1 - 2*theta/pi) - one_hot * s*2m/pi  ==  AirFace margin, scale folded in.
    k = jnp.float32(2.0 * s / math.pi)
    dm = jnp.float32(2.0 * s * m / math.pi)
    out = (jnp.float32(s) - k * theta) - jnp.where(is_target, dm, jnp.float32(0.0))
    out_ref[...] = out.astype(out_ref.dtype)


# ----------------------------- wrapper ----------------------------------------

def _round_up(n, d):
    return (n + d - 1) // d * d


def airface_forward(x, weight, label, *, s=64.0, m=0.4, block_b=256, block_c=512):
    """Exact forward of the PyTorch AirFace module (device_id=None path)."""
    assert block_b % 8 == 0 and block_c % 128 == 0
    B, D = x.shape
    C, D2 = weight.shape
    assert D == D2

    tm = min(block_b, _round_up(B, 8))          # B-tile (multiple of 8)
    tn = min(block_c, _round_up(C, 128))        # C-tile (multiple of 128, lane-dense)
    b_pad = _round_up(B, tm)
    c_pad = _round_up(C, tn)

    xp = jnp.pad(x, ((0, b_pad - B), (0, 0))) if b_pad != B else x
    wp = jnp.pad(weight, ((0, c_pad - C), (0, 0))) if c_pad != C else weight

    lbl = label.astype(jnp.int32).reshape(B, 1)
    if b_pad != B:
        lbl = jnp.pad(lbl, ((0, b_pad - B), (0, 0)), constant_values=-1)

    grid = (b_pad // tm, c_pad // tn)
    out = pl.pallas_call(
        functools.partial(_airface_kernel, s=float(s), m=float(m), block_c=tn),
        out_shape=jax.ShapeDtypeStruct((b_pad, c_pad), jnp.float32),
        grid=grid,
        in_specs=[
            pl.BlockSpec((tm, 1), lambda i, j: (i, 0)),     # label (constant over j)
            pl.BlockSpec((tm, D), lambda i, j: (i, 0)),     # x     (constant over j)
            pl.BlockSpec((tn, D), lambda i, j: (j, 0)),     # W     (streams over C)
        ],
        out_specs=pl.BlockSpec((tm, tn), lambda i, j: (i, j)),
        compiler_params=pltpu.CompilerParams(
            dimension_semantics=("parallel", "parallel")),
    )(lbl, xp, wp)

    return out[:B, :C]


def airface_reference(x, weight, label, *, s=64.0, m=0.4):
    """Pure-JAX reference mirroring the PyTorch forward."""
    xn = x / jnp.maximum(jnp.linalg.norm(x, axis=1, keepdims=True), 1e-12)
    wn = weight / jnp.maximum(jnp.linalg.norm(weight, axis=1, keepdims=True), 1e-12)
    cosine = jnp.clip(xn @ wn.T, -1.0, 1.0)
    theta = jnp.arccos(cosine)
    theta_m = 1.0 - 2.0 * (theta + m) / math.pi
    theta_v = 1.0 - 2.0 * theta / math.pi
    one_hot = jax.nn.one_hot(label, weight.shape[0], dtype=cosine.dtype)
    return (one_hot * theta_m + (1.0 - one_hot) * theta_v) * s


# ----------------------------- main -------------------------------------------

if __name__ == "__main__":
    # Small but non-trivial: B=12 (pads to a multiple of 8), C=1000 (pads to a
    # 128-multiple), exercising multi-tile grids, padding and per-tile one-hot offsets.
    B, D, C = 12, 32, 1000

    key = jax.random.PRNGKey(0)
    kx, kw, kl = jax.random.split(key, 3)

    x = jax.random.normal(kx, (B, D), dtype=jnp.float32)

    # deterministic xavier_uniform_-style init for weight (out_features, in_features)
    bound = math.sqrt(6.0 / (D + C))
    weight = jax.random.uniform(kw, (C, D), minval=-bound, maxval=bound,
                                dtype=jnp.float32)

    label = jax.random.randint(kl, (B,), 0, C, dtype=jnp.int32)

    ref = airface_reference(x, weight, label)

    # Small tiles -> (2 x 8) grid, exercises tiling / one-hot column offsets.
    out = airface_forward(x, weight, label, block_b=8, block_c=128)
    out = jax.block_until_ready(out)
    assert out.shape == (B, C) and out.dtype == jnp.float32
    assert jnp.allclose(out, ref, atol=2e-3, rtol=1e-3), "mismatch (small tiles)"

    # Default (production-sized) tiles -> single (1 x 1) grid at this shape.
    out2 = jax.block_until_ready(airface_forward(x, weight, label))
    assert jnp.allclose(out2, ref, atol=2e-3, rtol=1e-3), "mismatch (default tiles)"

    print("KERNEL_OK")
</pallas_src>

<mosaic_0001>
module attributes {stable_mosaic.version = 11 : i64} {
  func.func @_airface_kernel(%arg0: i32, %arg1: i32, %arg2: memref<8x1xi32, #tpu.memory_space<vmem>>, %arg3: memref<8x32xf32, #tpu.memory_space<vmem>>, %arg4: memref<128x32xf32, #tpu.memory_space<vmem>>, %arg5: memref<8x128xf32, #tpu.memory_space<vmem>>) attributes {dimension_semantics = [#tpu.dimension_semantics<parallel>, #tpu.dimension_semantics<parallel>], iteration_bounds = array<i64: 2, 8>, scalar_prefetch = 0 : i64, scratch_operands = 0 : i64, tpu.core_type = #tpu.core_type<tc>, window_params = [{transform_indices = @transform_0, window_bounds = array<i64: 8, 1>}, {transform_indices = @transform_1, window_bounds = array<i64: 8, 32>}, {transform_indices = @transform_2, window_bounds = array<i64: 128, 32>}, {transform_indices = @transform_3, window_bounds = array<i64: 8, 128>}]} {
    %c0 = arith.constant 0 : index
    %c0_0 = arith.constant 0 : index
    %0 = vector.load %arg3[%c0, %c0_0] : memref<8x32xf32, #tpu.memory_space<vmem>>, vector<8x32xf32>
    %1 = arith.mulf %0, %0 : vector<8x32xf32>
    %cst = arith.constant dense<0.000000e+00> : vector<8xf32>
    %2 = vector.multi_reduction <add>, %1, %cst [1] : vector<8x32xf32> to vector<8xf32>
    %3 = vector.shape_cast %2 : vector<8xf32> to vector<8x1xf32>
    %cst_1 = arith.constant 1.000000e-24 : f32
    %4 = vector.broadcast %cst_1 : f32 to vector<8x1xf32>
    %5 = arith.maximumf %3, %4 : vector<8x1xf32>
    %6 = math.rsqrt %5 : vector<8x1xf32>
    %7 = vector.broadcast %6 : vector<8x1xf32> to vector<8x32xf32>
    %8 = arith.mulf %0, %7 : vector<8x32xf32>
    %c0_2 = arith.constant 0 : index
    %c0_3 = arith.constant 0 : index
    %9 = vector.load %arg4[%c0_2, %c0_3] : memref<128x32xf32, #tpu.memory_space<vmem>>, vector<128x32xf32>
    %10 = arith.mulf %9, %9 : vector<128x32xf32>
    %cst_4 = arith.constant dense<0.000000e+00> : vector<128xf32>
    %11 = vector.multi_reduction <add>, %10, %cst_4 [1] : vector<128x32xf32> to vector<128xf32>
    %12 = vector.shape_cast %11 : vector<128xf32> to vector<128x1xf32>
    %cst_5 = arith.constant 1.000000e-24 : f32
    %13 = vector.broadcast %cst_5 : f32 to vector<128x1xf32>
    %14 = arith.maximumf %12, %13 : vector<128x1xf32>
    %15 = math.rsqrt %14 : vector<128x1xf32>
    %16 = vector.broadcast %15 : vector<128x1xf32> to vector<128x32xf32>
    %17 = arith.mulf %9, %16 : vector<128x32xf32>
    %cst_6 = arith.constant dense<0.000000e+00> : vector<8x128xf32>
    %18 = tpu.matmul %8, %17, %cst_6 {dimension_numbers = #tpu.dot_dimension_numbers<[1], [1], [0], [0], [0, 0, 1, 0], [], []>} : vector<8x32xf32>, vector<128x32xf32>, vector<8x128xf32> -> vector<8x128xf32>
    %cst_7 = arith.constant -1.000000e+00 : f32
    %cst_8 = arith.constant 1.000000e+00 : f32
    %19 = vector.broadcast %cst_7 : f32 to vector<8x128xf32>
    %20 = arith.maximumf %19, %18 : vector<8x128xf32>
    %21 = vector.broadcast %cst_8 : f32 to vector<8x128xf32>
    %22 = arith.minimumf %21, %20 : vector<8x128xf32>
    %23 = math.absf %22 : vector<8x128xf32>
    %cst_9 = arith.constant -0.0012624911 : f32
    %24 = vector.broadcast %cst_9 : f32 to vector<8x128xf32>
    %25 = arith.mulf %24, %23 : vector<8x128xf32>
    %cst_10 = arith.constant 6.670090e-03 : f32
    %26 = vector.broadcast %cst_10 : f32 to vector<8x128xf32>
    %27 = arith.addf %25, %26 : vector<8x128xf32>
    %28 = arith.mulf %27, %23 : vector<8x128xf32>
    %cst_11 = arith.constant -0.0170881264 : f32
    %29 = vector.broadcast %cst_11 : f32 to vector<8x128xf32>
    %30 = arith.addf %28, %29 : vector<8x128xf32>
    %31 = arith.mulf %30, %23 : vector<8x128xf32>
    %cst_12 = arith.constant 0.0308918804 : f32
    %32 = vector.broadcast %cst_12 : f32 to vector<8x128xf32>
    %33 = arith.addf %31, %32 : vector<8x128xf32>
    %34 = arith.mulf %33, %23 : vector<8x128xf32>
    %cst_13 = arith.constant -0.0501743034 : f32
    %35 = vector.broadcast %cst_13 : f32 to vector<8x128xf32>
    %36 = arith.addf %34, %35 : vector<8x128xf32>
    %37 = arith.mulf %36, %23 : vector<8x128xf32>
    %cst_14 = arith.constant 0.0889789909 : f32
    %38 = vector.broadcast %cst_14 : f32 to vector<8x128xf32>
    %39 = arith.addf %37, %38 : vector<8x128xf32>
    %40 = arith.mulf %39, %23 : vector<8x128xf32>
    %cst_15 = arith.constant -0.214598805 : f32
    %41 = vector.broadcast %cst_15 : f32 to vector<8x128xf32>
    %42 = arith.addf %40, %41 : vector<8x128xf32>
    %43 = arith.mulf %42, %23 : vector<8x128xf32>
    %cst_16 = arith.constant 1.57079625 : f32
    %44 = vector.broadcast %cst_16 : f32 to vector<8x128xf32>
    %45 = arith.addf %43, %44 : vector<8x128xf32>
    %cst_17 = arith.constant 1.000000e+00 : f32
    %46 = vector.broadcast %cst_17 : f32 to vector<8x128xf32>
    %47 = arith.subf %46, %23 : vector<8x128xf32>
    %cst_18 = arith.constant 0.000000e+00 : f32
    %48 = vector.broadcast %cst_18 : f32 to vector<8x128xf32>
    %49 = arith.maximumf %47, %48 : vector<8x128xf32>
    %50 = math.sqrt %49 : vector<8x128xf32>
    %51 = arith.mulf %50, %45 : vector<8x128xf32>
    %cst_19 = arith.constant 0.000000e+00 : f32
    %52 = vector.broadcast %cst_19 : f32 to vector<8x128xf32>
    %53 = arith.cmpf oge, %22, %52 : vector<8x128xf32>
    %cst_20 = arith.constant 3.14159274 : f32
    %54 = vector.broadcast %cst_20 : f32 to vector<8x128xf32>
    %55 = arith.subf %54, %51 : vector<8x128xf32>
    %56 = arith.select %53, %51, %55 : vector<8x128xi1>, vector<8x128xf32>
    %57 = tpu.iota {dimensions = array<i32: 1>} : vector<8x128xi32>
    %c128_i32 = arith.constant 128 : i32
    %58 = arith.muli %arg1, %c128_i32 : i32
    %59 = vector.broadcast %58 : i32 to vector<8x128xi32>
    %60 = arith.addi %57, %59 : vector<8x128xi32>
    %c0_21 = arith.constant 0 : index
    %c0_22 = arith.constant 0 : index
    %61 = vector.load %arg2[%c0_21, %c0_22] : memref<8x1xi32, #tpu.memory_space<vmem>>, vector<8x1xi32>
    %62 = vector.broadcast %61 : vector<8x1xi32> to vector<8x128xi32>
    %63 = arith.cmpi eq, %60, %62 : vector<8x128xi32>
    %cst_23 = arith.constant 40.7436638 : f32
    %64 = vector.broadcast %cst_23 : f32 to vector<8x128xf32>
    %65 = arith.mulf %64, %56 : vector<8x128xf32>
    %cst_24 = arith.constant 6.400000e+01 : f32
    %66 = vector.broadcast %cst_24 : f32 to vector<8x128xf32>
    %67 = arith.subf %66, %65 : vector<8x128xf32>
    %cst_25 = arith.constant 16.2974663 : f32
    %cst_26 = arith.constant 0.000000e+00 : f32
    %68 = vector.broadcast %cst_25 : f32 to vector<8x128xf32>
    %69 = vector.broadcast %cst_26 : f32 to vector<8x128xf32>
    %70 = arith.select %63, %68, %69 : vector<8x128xi1>, vector<8x128xf32>
    %71 = arith.subf %67, %70 : vector<8x128xf32>
    %c0_27 = arith.constant 0 : index
    %c0_28 = arith.constant 0 : index
    %72 = vector.load %arg5[%c0_27, %c0_28] : memref<8x128xf32, #tpu.memory_space<vmem>>, vector<8x128xf32>
    tpu.vector_store %arg5[%c0_27, %c0_28], %71 {strides = array<i32>} : memref<8x128xf32, #tpu.memory_space<vmem>>, vector<8x128xf32>,
    return
  }
  func.func @transform_0(%arg0: i32, %arg1: i32) -> (i32, i32) {
    %c0_i32 = arith.constant 0 : i32
    %c0_i32_0 = arith.constant 0 : i32
    return %arg0, %c0_i32 : i32, i32
  }
  func.func @transform_1(%arg0: i32, %arg1: i32) -> (i32, i32) {
    %c0_i32 = arith.constant 0 : i32
    %c0_i32_0 = arith.constant 0 : i32
    return %arg0, %c0_i32 : i32, i32
  }
  func.func @transform_2(%arg0: i32, %arg1: i32) -> (i32, i32) {
    %c0_i32 = arith.constant 0 : i32
    %c0_i32_0 = arith.constant 0 : i32
    return %arg1, %c0_i32 : i32, i32
  }
  func.func @transform_3(%arg0: i32, %arg1: i32) -> (i32, i32) {
    %c0_i32 = arith.constant 0 : i32
    return %arg0, %arg1 : i32, i32
  }
}

</mosaic_0001>

<llo_original>
// kernel: tpu_custom_call.1
$region0: #{tpu_custom_call.1}
  #allocation0 [shape = 'u32[]', space=smem, size = 0x4, offset = 0x4, fixed_abs, tag = 'smem constant byte address 0x4 - core index']
  #allocation1 [shape = 'u32[72,128]{1,0:T(1,128)}', space=vmem, size = 0x9000, scoped, tag = 'internal scratch']
  %s0 = inlined_call_operand.vmem [shape: s32[16,1], index: 0, kind: input, shape index: {}]
  %s1 = inlined_call_operand.vmem [shape: f32[16,32], index: 1, kind: input, shape index: {}]
  %s2 = inlined_call_operand.vmem [shape: f32[1024,32], index: 2, kind: input, shape index: {}]
  %s3 = inlined_call_operand.hbm [shape: f32[16,1024], index: 3, kind: output, shape index: {}]
  %s4 = sld [smem:[#allocation0]]
  $region45: #{tpu_custom_call.1} parent=0
    _
  %s6 = ssub.s32 1, %s4
  %s7 = scalar_select 0, %s6, %s4
  $region1: #{tpu_custom_call.1} parent=0
    #allocation2 [shape = 'u8[8192]{0}', space=vmem, size = 0x2000, scoped, tag = 'output window, operand 0']
    #allocation3 [shape = 's32[2]{0}', space=sflag, size = 0x8, scoped, tag = 'scoped memory for tpu_custom_call.1']
    %8 = vsyncpa [#allocation3], 0
    %s9 = scalar_lea.sflag [#allocation3], 1
    %10 = vsyncpa %s9, 0
    loop: start=0, step=1, limit=18
    $region2: #{tpu_custom_call.1} parent=1 // loop_pre_header
      _
    $region3: #{tpu_custom_call.1} parent=1 // loop_header
      %s12 = sphi 0, %s16
      %p13 = scmp.ge.s32.totalorder %s12, 18
      %s19 = sphi 0, %s31
      %s20 = sphi 0, %s27
      %s21 = sphi 0, %s19
      %s22 = sphi 0, %s20
      %s23 = sphi 0, %s21
      %s24 = sphi 0, %s22
      %s34 = sphi 0, %s36
      %s37 = sphi 0, %s34
      %s38 = sphi 0, %s37
      %s54 = sphi 0, %s38
      %s60 = sphi 0, %s62
      %s63 = sphi 0, %s60
      %s64 = sphi 0, %s63
      %s80 = sphi 0, %s64
      %s86 = sphi 0, %s88
      %s89 = sphi 0, %s86
      %s90 = sphi 0, %s89
      %s106 = sphi 0, %s90
      %s114 = sphi 0, %s116
      %s117 = sphi 0, %s114
      %s118 = sphi 0, %s117
      %s134 = sphi 0, %s118
    $region4: #{tpu_custom_call.1} parent=1 // loop_header_branch
      %15 = sbr.rel (%p13) target = $region8
    $region5: #{tpu_custom_call.1} parent=1 // loop_body
      %s17 = ssub.s32 %s12, 1
      %s18 = ssub.s32 %s12, 2
      %s25 = sadd.s32 1, %s20
      %p26 = scmp.ge.s32.totalorder %s25, 8
      %s27 = scalar_select %p26, 0, %s25
      %s28 = sadd.s32 1, %s19
      %s29 = scalar_select %p26, %s28, %s19
      %p30 = scmp.ge.s32.totalorder %s29, 2
      %s31 = scalar_select %p30, 0, %s29
      %s32 = ssub.s32 %s19, %s31
      %p33 = scmp.eq.s32.totalorder %s32, 0
      %s35 = sadd.s32 %s34, 1
      %s36 = scalar_select %p33, %s34, %s35
      %p39 = pneg %p33
      %p40 = scmp.eq.s32.totalorder %s12, 15
      %p41 = por %p39, %p40
      %p42 = scmp.ne.s32.totalorder %s34, %s37
      %p43 = scmp.eq.s32.totalorder %s12, 0
      %p44 = por %p42, %p43
      %p45 = scmp.ne.s32.totalorder %s34, %s37
      %p46 = scmp.eq.s32.totalorder %s17, 15
      %p47 = por %p45, %p46
      %p48 = scmp.ne.s32.totalorder %s37, %s38
      %p49 = scmp.eq.s32.totalorder %s17, 0
      %p50 = por %p48, %p49
      %p51 = scmp.ne.s32.totalorder %s37, %s38
      %p52 = scmp.eq.s32.totalorder %s18, 15
      %p53 = por %p51, %p52
      %p55 = scmp.ne.s32.totalorder %s38, %s54
      %p56 = scmp.eq.s32.totalorder %s18, 0
      %p57 = por %p55, %p56
      %s58 = ssub.s32 %s19, %s31
      %p59 = scmp.eq.s32.totalorder %s58, 0
      %s61 = sadd.s32 %s60, 1
      %s62 = scalar_select %p59, %s60, %s61
      %p65 = pneg %p59
      %p66 = scmp.eq.s32.totalorder %s12, 15
      %p67 = por %p65, %p66
      %p68 = scmp.ne.s32.totalorder %s60, %s63
      %p69 = scmp.eq.s32.totalorder %s12, 0
      %p70 = por %p68, %p69
      %p71 = scmp.ne.s32.totalorder %s60, %s63
      %p72 = scmp.eq.s32.totalorder %s17, 15
      %p73 = por %p71, %p72
      %p74 = scmp.ne.s32.totalorder %s63, %s64
      %p75 = scmp.eq.s32.totalorder %s17, 0
      %p76 = por %p74, %p75
      %p77 = scmp.ne.s32.totalorder %s63, %s64
      %p78 = scmp.eq.s32.totalorder %s18, 15
      %p79 = por %p77, %p78
      %p81 = scmp.ne.s32.totalorder %s64, %s80
      %p82 = scmp.eq.s32.totalorder %s18, 0
      %p83 = por %p81, %p82
      %s84 = ssub.s32 %s20, %s27
      %p85 = scmp.eq.s32.totalorder %s84, 0
      %s87 = sadd.s32 %s86, 1
      %s88 = scalar_select %p85, %s86, %s87
      %p91 = pneg %p85
      %p92 = scmp.eq.s32.totalorder %s12, 15
      %p93 = por %p91, %p92
      %p94 = scmp.ne.s32.totalorder %s86, %s89
      %p95 = scmp.eq.s32.totalorder %s12, 0
      %p96 = por %p94, %p95
      %p97 = scmp.ne.s32.totalorder %s86, %s89
      %p98 = scmp.eq.s32.totalorder %s17, 15
      %p99 = por %p97, %p98
      %p100 = scmp.ne.s32.totalorder %s89, %s90
      %p101 = scmp.eq.s32.totalorder %s17, 0
      %p102 = por %p100, %p101
      %p103 = scmp.ne.s32.totalorder %s89, %s90
      %p104 = scmp.eq.s32.totalorder %s18, 15
      %p105 = por %p103, %p104
      %p107 = scmp.ne.s32.totalorder %s90, %s106
      %p108 = scmp.eq.s32.totalorder %s18, 0
      %p109 = por %p107, %p108
      %s110 = ssub.s32 %s19, %s31
      %s111 = ssub.s32 %s20, %s27
      %s112 = sor.u32 %s110, %s111
      %p113 = scmp.eq.s32.totalorder %s112, 0
      %s115 = sadd.s32 %s114, 1
      %s116 = scalar_select %p113, %s114, %s115
      %p119 = pneg %p113
      %p120 = scmp.eq.s32.totalorder %s12, 15
      %p121 = por %p119, %p120
      %p122 = scmp.ne.s32.totalorder %s114, %s117
      %p123 = scmp.eq.s32.totalorder %s12, 0
      %p124 = por %p122, %p123
      %p125 = scmp.ne.s32.totalorder %s114, %s117
      %p126 = scmp.eq.s32.totalorder %s17, 15
      %p127 = por %p125, %p126
      %p128 = scmp.ne.s32.totalorder %s117, %s118
      %p129 = scmp.eq.s32.totalorder %s17, 0
      %p130 = por %p128, %p129
      %p131 = scmp.ne.s32.totalorder %s117, %s118
      %p132 = scmp.eq.s32.totalorder %s18, 15
      %p133 = por %p131, %p132
      %p135 = scmp.ne.s32.totalorder %s118, %s134
      %p136 = scmp.eq.s32.totalorder %s18, 0
      %p137 = por %p135, %p136
      %p138 = scmp.le.s32.totalorder 1, %s12
      %p139 = scmp.lt.s32.totalorder %s12, 17
      %p140 = pnand %p138, %p139
      %p141 = pneg %p140
      // Predicated region
      $region9: #{tpu_custom_call.1} parent=5 // pred_check
        _
      $region10: #{tpu_custom_call.1} parent=5 // pred_check_branch
        %143 = sbr.rel (%p140) target = $region12
      $region11: #{tpu_custom_call.1} parent=5 // pred_region
        %s144 = ssub.s32 %s12, 1
      $region12: #{tpu_custom_call.1} parent=5 // pred_fallthru
        _
      %p145 = scmp.lt.s32.totalorder %s12, 16
      // Predicated region
      $region13: #{tpu_custom_call.1} parent=5 // pred_check
        %p146 = pneg %p145
      $region14: #{tpu_custom_call.1} parent=5 // pred_check_branch
        %148 = sbr.rel (%p146) target = $region16
      $region15: #{tpu_custom_call.1} parent=5 // pred_region
        // Predicated region
        $region17: #{tpu_custom_call.1} parent=15 // pred_check
          %p149 = pneg %p44
        $region18: #{tpu_custom_call.1} parent=15 // pred_check_branch
          %151 = sbr.rel (%p149) target = $region20
        $region19: #{tpu_custom_call.1} parent=15 // pred_region
          %p152 = scmp.lt.s32.totalorder %s19, 1
          %s153 = scalar_select %p152, %s19, 1
          %s154 = smul.addr %s153, 8
          %s155 = scalar_lea.vmem %s0, %s154
        $region20: #{tpu_custom_call.1} parent=15 // pred_fallthru
          _
        // Predicated region
        $region21: #{tpu_custom_call.1} parent=15 // pred_check
          %p156 = pneg %p70
        $region22: #{tpu_custom_call.1} parent=15 // pred_check_branch
          %158 = sbr.rel (%p156) target = $region24
        $region23: #{tpu_custom_call.1} parent=15 // pred_region
          %p159 = scmp.lt.s32.totalorder %s19, 1
          %s160 = scalar_select %p159, %s19, 1
          %s161 = smul.addr %s160, 8
          %s162 = scalar_lea.vmem %s1, %s161
        $region24: #{tpu_custom_call.1} parent=15 // pred_fallthru
          _
        // Predicated region
        $region25: #{tpu_custom_call.1} parent=15 // pred_check
          %p163 = pneg %p96
        $region26: #{tpu_custom_call.1} parent=15 // pred_check_branch
          %165 = sbr.rel (%p163) target = $region28
        $region27: #{tpu_custom_call.1} parent=15 // pred_region
          %s166 = smul.u32 16, %s20
          %p167 = scmp.lt.s32.totalorder %s166, 127
          %s168 = scalar_select %p167, %s166, 127
          %s169 = smul.addr %s168, 8
          %s170 = scalar_lea.vmem %s2, %s169
          %s171 = smul.u32 16, %s20
        $region28: #{tpu_custom_call.1} parent=15 // pred_fallthru
          _
      $region16: #{tpu_custom_call.1} parent=5 // pred_fallthru
        _
      %p172 = scmp.le.s32.totalorder 1, %s12
      %p173 = scmp.lt.s32.totalorder %s12, 17
      %p174 = pnand %p172, %p173
      %p175 = pneg %p174
      // Predicated region
      $region29: #{tpu_custom_call.1} parent=5 // pred_check
        _
      $region30: #{tpu_custom_call.1} parent=5 // pred_check_branch
        %177 = sbr.rel (%p174) target = $region32
      $region31: #{tpu_custom_call.1} parent=5 // pred_region
        %s178 = ssub.s32 %s12, 1
        %p179 = scmp.lt.s32.totalorder %s21, 1
        %s180 = scalar_select %p179, %s21, 1
        %s181 = smul.addr %s180, 8
        %s182 = scalar_lea.vmem %s0, %s181
        %p183 = pneg %p50
        %p184 = pneg %p47
        %p185 = scmp.lt.s32.totalorder %s21, 1
        %s186 = scalar_select %p185, %s21, 1
        %s187 = smul.addr %s186, 8
        %s188 = scalar_lea.vmem %s1, %s187
        %p189 = pneg %p76
        %p190 = pneg %p73
        %s191 = smul.u32 16, %s22
        %p192 = scmp.lt.s32.totalorder %s191, 127
        %s193 = scalar_select %p192, %s191, 127
        %s194 = smul.addr %s193, 8
        %s195 = scalar_lea.vmem %s2, %s194
        %p196 = pneg %p102
        %p197 = pneg %p99
        %p198 = pneg %p130
        %p199 = pneg %p127
        %s200 = sand.u32 %s117, 1
        %s201 = scalar_lea.sflag [#allocation3], %s200
        %s202 = sand.u32 %s117, 1
        %s203 = smul.addr %s202, 8
        %s204 = scalar_lea.vmem [#allocation2], %s203
        %p205 = scmp.lt.s32.totalorder %s21, 1
        %s206 = scalar_select %p205, %s21, 1
        %s207 = smul.addr %s206, 8
        %s208 = scalar_lea.vmem %s0, %s207
        %p209 = scmp.lt.s32.totalorder %s21, 1
        %s210 = scalar_select %p209, %s21, 1
        %s211 = smul.addr %s210, 8
        %s212 = scalar_lea.vmem %s1, %s211
        %s213 = smul.u32 16, %s22
        %p214 = scmp.lt.s32.totalorder %s213, 127
        %s215 = scalar_select %p214, %s213, 127
        %s216 = smul.addr %s215, 8
        %s217 = scalar_lea.vmem %s2, %s216
        %s218 = smul.u32 16, %s22
        %v219 = vld [vmem:[%s212] sm:$0xff]
        %v220 = vmul.f32 %v219, %v219
        %vm221 = vcmask 261120
        %v222 = vsel %vm221, %v220, 0.0
        %223 = vadd.xlane.f32.xlu0 %v222
        %v224 = vpop.xlane.xlu0 %223
        %v225 = vmax.f32 %v224, 1e-24
        %v226 = vrsqrt.pop %v225
        %v227 = vmul.f32 %v226, %v225
        %v228 = vmul.f32 %v227, %v226
        %v229 = vmul.f32 0.5, %v228
        %v230 = vsub.f32 1.5, %v229
        %v231 = vmul.f32 %v226, %v230
        %vm232 = vweird.f32 %v225
        %vm233 = vweird.f32 %v226
        %vm234 = vmor %vm232, %vm233
        %v235 = vsel %vm234, %v226, %v231
        %v236 = vmul.f32 %v219, %v235
        %v237 = vld [vmem:[%s217] sm:$0xff]
        %v238 = vld [vmem:[%s217 + $0x8] sm:$0xff]
        %v239 = vld [vmem:[%s217 + $0x10] sm:$0xff]
        %v240 = vld [vmem:[%s217 + $0x18] sm:$0xff]
        %v241 = vld [vmem:[%s217 + $0x20] sm:$0xff]
        %v242 = vld [vmem:[%s217 + $0x28] sm:$0xff]
        %v243 = vld [vmem:[%s217 + $0x30] sm:$0xff]
        %v244 = vld [vmem:[%s217 + $0x38] sm:$0xff]
        %v245 = vld [vmem:[%s217 + $0x40] sm:$0xff]
        %v246 = vld [vmem:[%s217 + $0x48] sm:$0xff]
        %v247 = vld [vmem:[%s217 + $0x50] sm:$0xff]
        %v248 = vld [vmem:[%s217 + $0x58] sm:$0xff]
        %v249 = vld [vmem:[%s217 + $0x60] sm:$0xff]
        %v250 = vld [vmem:[%s217 + $0x68] sm:$0xff]
        %v251 = vld [vmem:[%s217 + $0x70] sm:$0xff]
        %v252 = vld [vmem:[%s217 + $0x78] sm:$0xff]
        %v253 = vmul.f32 %v237, %v237
        %v254 = vmul.f32 %v238, %v238
        %v255 = vmul.f32 %v239, %v239
        %v256 = vmul.f32 %v240, %v240
        %v257 = vmul.f32 %v241, %v241
        %v258 = vmul.f32 %v242, %v242
        %v259 = vmul.f32 %v243, %v243
        %v260 = vmul.f32 %v244, %v244
        %v261 = vmul.f32 %v245, %v245
        %v262 = vmul.f32 %v246, %v246
        %v263 = vmul.f32 %v247, %v247
        %v264 = vmul.f32 %v248, %v248
        %v265 = vmul.f32 %v249, %v249
        %v266 = vmul.f32 %v250, %v250
        %v267 = vmul.f32 %v251, %v251
        %v268 = vmul.f32 %v252, %v252
        %v269 = vsel %vm221, %v253, 0.0
        %270 = vadd.xlane.f32.xlu0 %v269
        %v271 = vpop.xlane.xlu0 %270
        %v272 = vsel %vm221, %v254, 0.0
        %273 = vadd.xlane.f32.xlu0 %v272
        %v274 = vpop.xlane.xlu0 %273
        %v275 = vsel %vm221, %v255, 0.0
        %276 = vadd.xlane.f32.xlu0 %v275
        %v277 = vpop.xlane.xlu0 %276
        %v278 = vsel %vm221, %v256, 0.0
        %279 = vadd.xlane.f32.xlu0 %v278
        %v280 = vpop.xlane.xlu0 %279
        %v281 = vsel %vm221, %v257, 0.0
        %282 = vadd.xlane.f32.xlu0 %v281
        %v283 = vpop.xlane.xlu0 %282
        %v284 = vsel %vm221, %v258, 0.0
        %285 = vadd.xlane.f32.xlu0 %v284
        %v286 = vpop.xlane.xlu0 %285
        %v287 = vsel %vm221, %v259, 0.0
        %288 = vadd.xlane.f32.xlu0 %v287
        %v289 = vpop.xlane.xlu0 %288
        %v290 = vsel %vm221, %v260, 0.0
        %291 = vadd.xlane.f32.xlu0 %v290
        %v292 = vpop.xlane.xlu0 %291
        %v293 = vsel %vm221, %v261, 0.0
        %294 = vadd.xlane.f32.xlu0 %v293
        %v295 = vpop.xlane.xlu0 %294
        %v296 = vsel %vm221, %v262, 0.0
        %297 = vadd.xlane.f32.xlu0 %v296
        %v298 = vpop.xlane.xlu0 %297
        %v299 = vsel %vm221, %v263, 0.0
        %300 = vadd.xlane.f32.xlu0 %v299
        %v301 = vpop.xlane.xlu0 %300
        %v302 = vsel %vm221, %v264, 0.0
        %303 = vadd.xlane.f32.xlu0 %v302
        %v304 = vpop.xlane.xlu0 %303
        %v305 = vsel %vm221, %v265, 0.0
        %306 = vadd.xlane.f32.xlu0 %v305
        %v307 = vpop.xlane.xlu0 %306
        %v308 = vsel %vm221, %v266, 0.0
        %309 = vadd.xlane.f32.xlu0 %v308
        %v310 = vpop.xlane.xlu0 %309
        %v311 = vsel %vm221, %v267, 0.0
        %312 = vadd.xlane.f32.xlu0 %v311
        %v313 = vpop.xlane.xlu0 %312
        %v314 = vsel %vm221, %v268, 0.0
        %315 = vadd.xlane.f32.xlu0 %v314
        %v316 = vpop.xlane.xlu0 %315
        %v317 = vmax.f32 %v271, 1e-24
        %v318 = vmax.f32 %v274, 1e-24
        %v319 = vmax.f32 %v277, 1e-24
        %v320 = vmax.f32 %v280, 1e-24
        %v321 = vmax.f32 %v283, 1e-24
        %v322 = vmax.f32 %v286, 1e-24
        %v323 = vmax.f32 %v289, 1e-24
        %v324 = vmax.f32 %v292, 1e-24
        %v325 = vmax.f32 %v295, 1e-24
        %v326 = vmax.f32 %v298, 1e-24
        %v327 = vmax.f32 %v301, 1e-24
        %v328 = vmax.f32 %v304, 1e-24
        %v329 = vmax.f32 %v307, 1e-24
        %v330 = vmax.f32 %v310, 1e-24
        %v331 = vmax.f32 %v313, 1e-24
        %v332 = vmax.f32 %v316, 1e-24
        %v333 = vrsqrt.pop %v317
        %v334 = vmul.f32 %v333, %v317
        %v335 = vmul.f32 %v334, %v333
        %v336 = vmul.f32 0.5, %v335
        %v337 = vsub.f32 1.5, %v336
        %v338 = vmul.f32 %v333, %v337
        %vm339 = vweird.f32 %v317
        %vm340 = vweird.f32 %v333
        %vm341 = vmor %vm339, %vm340
        %v342 = vsel %vm341, %v333, %v338
        %v343 = vrsqrt.pop %v318
        %v344 = vmul.f32 %v343, %v318
        %v345 = vmul.f32 %v344, %v343
        %v346 = vmul.f32 0.5, %v345
        %v347 = vsub.f32 1.5, %v346
        %v348 = vmul.f32 %v343, %v347
        %vm349 = vweird.f32 %v318
        %vm350 = vweird.f32 %v343
        %vm351 = vmor %vm349, %vm350
        %v352 = vsel %vm351, %v343, %v348
        %v353 = vrsqrt.pop %v319
        %v354 = vmul.f32 %v353, %v319
        %v355 = vmul.f32 %v354, %v353
        %v356 = vmul.f32 0.5, %v355
        %v357 = vsub.f32 1.5, %v356
        %v358 = vmul.f32 %v353, %v357
        %vm359 = vweird.f32 %v319
        %vm360 = vweird.f32 %v353
        %vm361 = vmor %vm359, %vm360
        %v362 = vsel %vm361, %v353, %v358
        %v363 = vrsqrt.pop %v320
        %v364 = vmul.f32 %v363, %v320
        %v365 = vmul.f32 %v364, %v363
        %v366 = vmul.f32 0.5, %v365
        %v367 = vsub.f32 1.5, %v366
        %v368 = vmul.f32 %v363, %v367
        %vm369 = vweird.f32 %v320
        %vm370 = vweird.f32 %v363
        %vm371 = vmor %vm369, %vm370
        %v372 = vsel %vm371, %v363, %v368
        %v373 = vrsqrt.pop %v321
        %v374 = vmul.f32 %v373, %v321
        %v375 = vmul.f32 %v374, %v373
        %v376 = vmul.f32 0.5, %v375
        %v377 = vsub.f32 1.5, %v376
        %v378 = vmul.f32 %v373, %v377
        %vm379 = vweird.f32 %v321
        %vm380 = vweird.f32 %v373
        %vm381 = vmor %vm379, %vm380
        %v382 = vsel %vm381, %v373, %v378
        %v383 = vrsqrt.pop %v322
        %v384 = vmul.f32 %v383, %v322
        %v385 = vmul.f32 %v384, %v383
        %v386 = vmul.f32 0.5, %v385
        %v387 = vsub.f32 1.5, %v386
        %v388 = vmul.f32 %v383, %v387
        %vm389 = vweird.f32 %v322
        %vm390 = vweird.f32 %v383
        %vm391 = vmor %vm389, %vm390
        %v392 = vsel %vm391, %v383, %v388
        %v393 = vrsqrt.pop %v323
        %v394 = vmul.f32 %v393, %v323
        %v395 = vmul.f32 %v394, %v393
        %v396 = vmul.f32 0.5, %v395
        %v397 = vsub.f32 1.5, %v396
        %v398 = vmul.f32 %v393, %v397
        %vm399 = vweird.f32 %v323
        %vm400 = vweird.f32 %v393
        %vm401 = vmor %vm399, %vm400
        %v402 = vsel %vm401, %v393, %v398
        %v403 = vrsqrt.pop %v324
        %v404 = vmul.f32 %v403, %v324
        %v405 = vmul.f32 %v404, %v403
        %v406 = vmul.f32 0.5, %v405
        %v407 = vsub.f32 1.5, %v406
        %v408 = vmul.f32 %v403, %v407
        %vm409 = vweird.f32 %v324
        %vm410 = vweird.f32 %v403
        %vm411 = vmor %vm409, %vm410
        %v412 = vsel %vm411, %v403, %v408
        %v413 = vrsqrt.pop %v325
        %v414 = vmul.f32 %v413, %v325
        %v415 = vmul.f32 %v414, %v413
        %v416 = vmul.f32 0.5, %v415
        %v417 = vsub.f32 1.5, %v416
        %v418 = vmul.f32 %v413, %v417
        %vm419 = vweird.f32 %v325
        %vm420 = vweird.f32 %v413
        %vm421 = vmor %vm419, %vm420
        %v422 = vsel %vm421, %v413, %v418
        %v423 = vrsqrt.pop %v326
        %v424 = vmul.f32 %v423, %v326
        %v425 = vmul.f32 %v424, %v423
        %v426 = vmul.f32 0.5, %v425
        %v427 = vsub.f32 1.5, %v426
        %v428 = vmul.f32 %v423, %v427
        %vm429 = vweird.f32 %v326
        %vm430 = vweird.f32 %v423
        %vm431 = vmor %vm429, %vm430
        %v432 = vsel %vm431, %v423, %v428
        %v433 = vrsqrt.pop %v327
        %v434 = vmul.f32 %v433, %v327
        %v435 = vmul.f32 %v434, %v433
        %v436 = vmul.f32 0.5, %v435
        %v437 = vsub.f32 1.5, %v436
        %v438 = vmul.f32 %v433, %v437
        %vm439 = vweird.f32 %v327
        %vm440 = vweird.f32 %v433
        %vm441 = vmor %vm439, %vm440
        %v442 = vsel %vm441, %v433, %v438
        %v443 = vrsqrt.pop %v328
        %v444 = vmul.f32 %v443, %v328
        %v445 = vmul.f32 %v444, %v443
        %v446 = vmul.f32 0.5, %v445
        %v447 = vsub.f32 1.5, %v446
        %v448 = vmul.f32 %v443, %v447
        %vm449 = vweird.f32 %v328
        %vm450 = vweird.f32 %v443
        %vm451 = vmor %vm449, %vm450
        %v452 = vsel %vm451, %v443, %v448
        %v453 = vrsqrt.pop %v329
        %v454 = vmul.f32 %v453, %v329
        %v455 = vmul.f32 %v454, %v453
        %v456 = vmul.f32 0.5, %v455
        %v457 = vsub.f32 1.5, %v456
        %v458 = vmul.f32 %v453, %v457
        %vm459 = vweird.f32 %v329
        %vm460 = vweird.f32 %v453
        %vm461 = vmor %vm459, %vm460
        %v462 = vsel %vm461, %v453, %v458
        %v463 = vrsqrt.pop %v330
        %v464 = vmul.f32 %v463, %v330
        %v465 = vmul.f32 %v464, %v463
        %v466 = vmul.f32 0.5, %v465
        %v467 = vsub.f32 1.5, %v466
        %v468 = vmul.f32 %v463, %v467
        %vm469 = vweird.f32 %v330
        %vm470 = vweird.f32 %v463
        %vm471 = vmor %vm469, %vm470
        %v472 = vsel %vm471, %v463, %v468
        %v473 = vrsqrt.pop %v331
        %v474 = vmul.f32 %v473, %v331
        %v475 = vmul.f32 %v474, %v473
        %v476 = vmul.f32 0.5, %v475
        %v477 = vsub.f32 1.5, %v476
        %v478 = vmul.f32 %v473, %v477
        %vm479 = vweird.f32 %v331
        %vm480 = vweird.f32 %v473
        %vm481 = vmor %vm479, %vm480
        %v482 = vsel %vm481, %v473, %v478
        %v483 = vrsqrt.pop %v332
        %v484 = vmul.f32 %v483, %v332
        %v485 = vmul.f32 %v484, %v483
        %v486 = vmul.f32 0.5, %v485
        %v487 = vsub.f32 1.5, %v486
        %v488 = vmul.f32 %v483, %v487
        %vm489 = vweird.f32 %v332
        %vm490 = vweird.f32 %v483
        %vm491 = vmor %vm489, %vm490
        %v492 = vsel %vm491, %v483, %v488
        %v493 = vmul.f32 %v237, %v342
        %v494 = vmul.f32 %v238, %v352
        %v495 = vmul.f32 %v239, %v362
        %v496 = vmul.f32 %v240, %v372
        %v497 = vmul.f32 %v241, %v382
        %v498 = vmul.f32 %v242, %v392
        %v499 = vmul.f32 %v243, %v402
        %v500 = vmul.f32 %v244, %v412
        %v501 = vmul.f32 %v245, %v422
        %v502 = vmul.f32 %v246, %v432
        %v503 = vmul.f32 %v247, %v442
        %v504 = vmul.f32 %v248, %v452
        %v505 = vmul.f32 %v249, %v462
        %v506 = vmul.f32 %v250, %v472
        %v507 = vmul.f32 %v251, %v482
        %v508 = vmul.f32 %v252, %v492
        %v510 = vsel %vm221, %v236, 0
        %v513 = vsel %vm221, %v493, 0
        %v516 = vsel %vm221, %v494, 0
        %v519 = vsel %vm221, %v495, 0
        %v522 = vsel %vm221, %v496, 0
        %v525 = vsel %vm221, %v497, 0
        %v528 = vsel %vm221, %v498, 0
        %v531 = vsel %vm221, %v499, 0
        %v534 = vsel %vm221, %v500, 0
        %v537 = vsel %vm221, %v501, 0
        %v540 = vsel %vm221, %v502, 0
        %v543 = vsel %vm221, %v503, 0
        %v546 = vsel %vm221, %v504, 0
        %v549 = vsel %vm221, %v505, 0
        %v552 = vsel %vm221, %v506, 0
        %v555 = vsel %vm221, %v507, 0
        %v558 = vsel %vm221, %v508, 0
        %560 = vmatpush.xpose.msra.mxu0 %v558
        %561 = vmatpush.xpose.msra.mxu0 %v555
        %562 = vmatpush.xpose.msra.mxu0 %v552
        %563 = vmatpush.xpose.msra.mxu0 %v549
        %564 = vmatpush.xpose.msra.mxu0 %v546
        %565 = vmatpush.xpose.msra.mxu0 %v543
        %566 = vmatpush.xpose.msra.mxu0 %v540
        %567 = vmatpush.xpose.msra.mxu0 %v537
        %568 = vmatpush.xpose.msra.mxu0 %v534
        %569 = vmatpush.xpose.msra.mxu0 %v531
        %570 = vmatpush.xpose.msra.mxu0 %v528
        %571 = vmatpush.xpose.msra.mxu0 %v525
        %572 = vmatpush.xpose.msra.mxu0 %v522
        %573 = vmatpush.xpose.msra.mxu0 %v519
        %574 = vmatpush.xpose.msra.mxu0 %v516
        %575 = vmatpush.xpose.msra.mxu0 %v513
        %576 = vmatmul.f32.gmra.mxu0 %v510
        %v577 = vpop.f32.mrf.mxu0
        %v578 = vadd.f32 0.0, %v577
        %579 = vdwg.mxu0
        %v580 = vmax.f32 %v578, -1.0
        %v581 = vmin.f32 %v580, 1.0
        %v582 = vand.u32 2147483647, %v581
        %v583 = vmul.f32 %v582, -0.0012624911
        %v584 = vadd.f32 %v583, 0.00667009
        %v585 = vmul.f32 %v584, %v582
        %v586 = vadd.f32 %v585, -0.017088126
        %v587 = vmul.f32 %v586, %v582
        %v588 = vadd.f32 %v587, 0.03089188
        %v589 = vmul.f32 %v588, %v582
        %v590 = vadd.f32 %v589, -0.050174303
        %v591 = vmul.f32 %v590, %v582
        %v592 = vadd.f32 %v591, 0.08897899
        %v593 = vmul.f32 %v592, %v582
        %v594 = vadd.f32 %v593, -0.2145988
        %v595 = vmul.f32 %v594, %v582
        %v596 = vadd.f32 %v595, 1.5707963
        %v597 = vsub.f32 1.0, %v582
        %v598 = vmax.f32 %v597, 0.0
        %v599 = vrsqrt.pop %v598
        %v600 = vmul.f32 %v599, %v598
        %v601 = vmul.f32 %v600, %v599
        %v602 = vmul.f32 0.5, %v601
        %v603 = vsub.f32 1.5, %v602
        %v604 = vmul.f32 %v599, %v603
        %v605 = vmul.f32 %v598, %v604
        %vm606 = vcmp.eq.f32.partialorder %v598, inf
        %v607 = vsel %vm606, %v598, %v605
        %vm608 = vcmp.eq.f32.partialorder %v598, 0.0
        %v609 = vand.u32 %v598, 2147483648
        %v610 = vsel %vm608, %v609, %v607
        %v611 = vmul.f32 %v610, %v596
        %vm612 = vcmp.ge.f32.partialorder %v581, 0.0
        %v613 = vsub.f32 3.1415927, %v611
        %v614 = vsel %vm612, %v611, %v613
        %v615 = vlaneseq
        %v616 = vand.u32 %v615, 127
        %s617 = smul.u32 %s22, 128
        %v618 = vstv %s617
        %v619 = vadd.s32 %v616, %v618
        %v620 = vld [vmem:[%s208] sm:$0xff]
        %621 = vset.pattern.permute.xlu0 0
        %622 = vperm.xlu0 %621, %v620
        %v623 = vpop.permute.xlu0 %622
        %vm624 = vcmp.eq.s32.totalorder %v619, %v623
        %v625 = vmul.f32 %v614, 40.743664
        %v626 = vsub.f32 64.0, %v625
        %v627 = vsel %vm624, 16.297466, 0.0
        %v628 = vsub.f32 %v626, %v627
        %629 = vst [vmem:[%s204] sm:$0xff] %v628
        %s630 = sand.u32 %s117, 1
        %s631 = scalar_lea.sflag [#allocation3], %s630
        %s632 = sand.u32 %s117, 1
        %s633 = smul.addr %s632, 8
        %s634 = scalar_lea.vmem [#allocation2], %s633
        // Predicated region
        $region33: #{tpu_custom_call.1} parent=31 // pred_check
          %p635 = pneg %p127
        $region34: #{tpu_custom_call.1} parent=31 // pred_check_branch
          %637 = sbr.rel (%p635) target = $region36
        $region35: #{tpu_custom_call.1} parent=31 // pred_region
          %639 = vsyncadd %s631, 0
          %s640 = smul.addr %s21, 8
          %s641 = sadd.s32 %s22, %s640
          %s642 = smul.addr %s641, 8
          %s643 = scalar_lea.hbm %s3, %s642
          %s645 = sshll.u32 %s634, 4
          %s646 = int_to_ptr.vmem [resolvable:$true] %s645
          %s647 = sshll.u32 %s643, 4
          %s648 = int_to_ptr.hbm [resolvable:$true] %s647
          %650 = dma.vmem_to_hbm [thread:$0]  %s646, 128, %s648, %s631
        $region36: #{tpu_custom_call.1} parent=31 // pred_fallthru
          _
      $region32: #{tpu_custom_call.1} parent=5 // pred_fallthru
        _
      %p651 = scmp.le.s32.totalorder 2, %s12
      // Predicated region
      $region37: #{tpu_custom_call.1} parent=5 // pred_check
        %p652 = pneg %p651
      $region38: #{tpu_custom_call.1} parent=5 // pred_check_branch
        %654 = sbr.rel (%p652) target = $region40
      $region39: #{tpu_custom_call.1} parent=5 // pred_region
        %s655 = ssub.s32 %s12, 2
        // Predicated region
        $region41: #{tpu_custom_call.1} parent=39 // pred_check
          %p656 = pneg %p133
        $region42: #{tpu_custom_call.1} parent=39 // pred_check_branch
          %658 = sbr.rel (%p656) target = $region44
        $region43: #{tpu_custom_call.1} parent=39 // pred_region
          %s659 = sand.u32 %s118, 1
          %s660 = scalar_lea.sflag [#allocation3], %s659
          %s661 = sand.u32 %s118, 1
          %s662 = smul.addr %s661, 8
          %s663 = scalar_lea.vmem [#allocation2], %s662
          %665 = dma.done %s660, 128
        $region44: #{tpu_custom_call.1} parent=39 // pred_fallthru
          _
      $region40: #{tpu_custom_call.1} parent=5 // pred_fallthru
        _
    $region6: #{tpu_custom_call.1} parent=1 // loop_footer
      %s16 = sadd.s32 1, %s12
    $region7: #{tpu_custom_call.1} parent=1 // loop_footer_branch
      %11 = sbr.rel target = $region3
    $region8: #{tpu_custom_call.1} parent=1 // loop_exit
      _
    %666 = vsyncpa [#allocation3], 1
    %s667 = scalar_lea.sflag [#allocation3], 1
    %668 = vsyncpa %s667, 1

</llo_original>
